<compile_context>
chip_gen: v6e
topology: v6e:2x2x1
jax: 0.10.0
libtpu: 0.0.40
codegen_flags: <defaults>
</compile_context>

<pallas_src>
import functools

import jax
import jax.numpy as jnp
from jax import lax
from jax.experimental import pallas as pl
from jax.experimental.pallas import tpu as pltpu

LOGIT_LAPLACE_EPS = 0.1  # module's only "parameter" (from __init__)
_LANE = 128
_SUBLANE = 8


def inmap(x, eps=LOGIT_LAPLACE_EPS):
    return (1.0 - 2.0 * eps) * x + eps


def unmap(x, eps=LOGIT_LAPLACE_EPS):
    return jnp.clip((x - eps) / (1.0 - 2.0 * eps), 0.0, 1.0)


def _round_up(x, m):
    return ((x + m - 1) // m) * m


def _loss_kernel(mu_ref, lnb_ref, t_ref, out_ref, *,
                 n_valid, block_rows, steps_per_split, mask_needed):
    c = pl.program_id(0)  # parallel split (megacore-friendly)
    i = pl.program_id(1)  # sequential reduction axis

    @pl.when(i == 0)
    def _():
        out_ref[...] = jnp.zeros_like(out_ref)

    mu = mu_ref[...].astype(jnp.float32)
    lnb = lnb_ref[...].astype(jnp.float32)
    t = t_ref[...].astype(jnp.float32)

    lt = jnp.log(t)
    l1t = jnp.log(1.0 - t)
    # torch.logit(t) == log(t) - log(1-t); log(t*(1-t)) == log(t) + log(1-t)
    # 1/exp(lnb) == exp(-lnb)  -> zero divides, 2 logs + 1 exp per element.
    term = jnp.abs((lt - l1t) - mu) * jnp.exp(-lnb) + lnb + (lt + l1t)

    if mask_needed:
        row0 = (c * steps_per_split + i) * block_rows
        r = lax.broadcasted_iota(jnp.int32, (block_rows, _LANE), 0)
        col = lax.broadcasted_iota(jnp.int32, (block_rows, _LANE), 1)
        flat = (row0 + r) * _LANE + col
        term = jnp.where(flat < n_valid, term, 0.0)

    # Fold the (block_rows, 128) tile into the resident (8, 128) accumulator
    # with pure VPU (vreg-wise) adds; the single expensive cross-lane reduce
    # happens exactly once, outside the kernel.
    out_ref[...] += jnp.sum(
        term.reshape(block_rows // _SUBLANE, _SUBLANE, _LANE), axis=0)


def logit_laplace_loss(mu, lnb, target, *, block_rows=1024, num_splits=2):
    """mu, lnb, target: float arrays of identical shape. Returns scalar mean loss."""
    assert mu.shape == lnb.shape == target.shape
    n_elems = mu.size

    rows = pl.cdiv(n_elems, _LANE)
    # Shrink the block for small inputs; always a multiple of 8 sublanes.
    block_rows = _round_up(min(block_rows, _round_up(rows, _SUBLANE)), _SUBLANE)

    rows_padded = _round_up(rows, block_rows * num_splits)
    padded_len = rows_padded * _LANE
    steps_per_split = rows_padded // (block_rows * num_splits)
    mask_needed = padded_len != n_elems

    def prep(x, fill):
        flat = x.reshape(-1).astype(jnp.float32)
        if mask_needed:
            flat = jnp.pad(flat, (0, padded_len - n_elems), constant_values=fill)
        return flat.reshape(rows_padded, _LANE)

    mu2 = prep(mu, 0.0)
    lnb2 = prep(lnb, 0.0)
    t2 = prep(target, 0.5)  # safe value: logs stay finite; masked to 0 anyway

    kernel = functools.partial(
        _loss_kernel,
        n_valid=n_elems,
        block_rows=block_rows,
        steps_per_split=steps_per_split,
        mask_needed=mask_needed,
    )

    in_blk = pl.BlockSpec((block_rows, _LANE),
                          lambda c, i: (c * steps_per_split + i, 0))
    out_blk = pl.BlockSpec((_SUBLANE, _LANE), lambda c, i: (c, 0))

    cost = pl.CostEstimate(
        flops=10 * n_elems,
        transcendentals=3 * n_elems,
        bytes_accessed=3 * 4 * n_elems + num_splits * _SUBLANE * _LANE * 4,
    )

    partials = pl.pallas_call(
        kernel,
        out_shape=jax.ShapeDtypeStruct((num_splits * _SUBLANE, _LANE), jnp.float32),
        grid_spec=pltpu.PrefetchScalarGridSpec(
            num_scalar_prefetch=0,
            grid=(num_splits, steps_per_split),
            in_specs=[in_blk, in_blk, in_blk],
            out_specs=out_blk,
        ),
        compiler_params=pltpu.CompilerParams(
            dimension_semantics=("parallel", "arbitrary"),
        ),
        cost_estimate=cost,
    )(mu2, lnb2, t2)

    # Single final cross-lane reduce + mean normalization (tiny, done in XLA).
    return jnp.sum(partials) / n_elems


def _reference_loss(mu, lnb, target):
    logit = jnp.log(target / (1.0 - target))
    b = jnp.exp(lnb)
    return jnp.mean(jnp.abs(logit - mu) / b + lnb + jnp.log(target * (1.0 - target)))


if __name__ == "__main__":
    # Small NCHW shapes consistent with an image-reconstruction loss.
    N, C, H, W = 2, 4, 16, 16
    key = jax.random.PRNGKey(0)
    k_mu, k_lnb, k_t = jax.random.split(key, 3)

    mu = jax.random.normal(k_mu, (N, C, H, W), dtype=jnp.float32)
    lnb = 0.1 * jax.random.normal(k_lnb, (N, C, H, W), dtype=jnp.float32)
    # target must lie strictly in (0, 1); use the module's inmap to map [0,1] -> [eps, 1-eps]
    target = inmap(jax.random.uniform(k_t, (N, C, H, W), dtype=jnp.float32))

    loss = jax.block_until_ready(logit_laplace_loss(mu, lnb, target))
    ref = jax.block_until_ready(_reference_loss(mu, lnb, target))

    assert jnp.allclose(loss, ref, rtol=1e-5, atol=1e-5), (loss, ref)
    print("KERNEL_OK")
</pallas_src>

<mosaic_0001>
module attributes {stable_mosaic.version = 11 : i64} {
  func.func @_loss_kernel(%arg0: i32, %arg1: i32, %arg2: memref<16x128xf32, #tpu.memory_space<vmem>>, %arg3: memref<16x128xf32, #tpu.memory_space<vmem>>, %arg4: memref<16x128xf32, #tpu.memory_space<vmem>>, %arg5: memref<8x128xf32, #tpu.memory_space<vmem>>) attributes {dimension_semantics = [#tpu.dimension_semantics<parallel>, #tpu.dimension_semantics<arbitrary>], iteration_bounds = array<i64: 2, 1>, scalar_prefetch = 0 : i64, scratch_operands = 0 : i64, tpu.core_type = #tpu.core_type<tc>, window_params = [{transform_indices = @transform_0, window_bounds = array<i64: 16, 128>}, {transform_indices = @transform_1, window_bounds = array<i64: 16, 128>}, {transform_indices = @transform_2, window_bounds = array<i64: 16, 128>}, {transform_indices = @transform_3, window_bounds = array<i64: 8, 128>}]} {
    %c0_i32 = arith.constant 0 : i32
    %0 = arith.cmpi eq, %arg1, %c0_i32 : i32
    %1 = arith.extui %0 : i1 to i32
    %c0_i32_0 = arith.constant 0 : i32
    %2 = arith.cmpi ne, %1, %c0_i32_0 : i32
    scf.if %2 {
      %cst_13 = arith.constant 0.000000e+00 : f32
      %39 = vector.broadcast %cst_13 : f32 to vector<8x128xf32>
      %c0_14 = arith.constant 0 : index
      %c0_15 = arith.constant 0 : index
      %40 = vector.load %arg5[%c0_14, %c0_15] : memref<8x128xf32, #tpu.memory_space<vmem>>, vector<8x128xf32>
      tpu.vector_store %arg5[%c0_14, %c0_15], %39 {strides = array<i32>} : memref<8x128xf32, #tpu.memory_space<vmem>>, vector<8x128xf32>,
    } else {
    }
    %c0 = arith.constant 0 : index
    %c0_1 = arith.constant 0 : index
    %3 = vector.load %arg2[%c0, %c0_1] : memref<16x128xf32, #tpu.memory_space<vmem>>, vector<16x128xf32>
    %c0_2 = arith.constant 0 : index
    %c0_3 = arith.constant 0 : index
    %4 = vector.load %arg3[%c0_2, %c0_3] : memref<16x128xf32, #tpu.memory_space<vmem>>, vector<16x128xf32>
    %c0_4 = arith.constant 0 : index
    %c0_5 = arith.constant 0 : index
    %5 = vector.load %arg4[%c0_4, %c0_5] : memref<16x128xf32, #tpu.memory_space<vmem>>, vector<16x128xf32>
    %6 = math.log %5 : vector<16x128xf32>
    %cst = arith.constant 1.000000e+00 : f32
    %7 = vector.broadcast %cst : f32 to vector<16x128xf32>
    %8 = arith.subf %7, %5 : vector<16x128xf32>
    %9 = math.log %8 : vector<16x128xf32>
    %10 = arith.subf %6, %9 : vector<16x128xf32>
    %11 = arith.subf %10, %3 : vector<16x128xf32>
    %12 = math.absf %11 : vector<16x128xf32>
    %cst_6 = arith.constant 0.000000e+00 : f32
    %13 = vector.broadcast %cst_6 : f32 to vector<16x128xf32>
    %14 = arith.subf %13, %4 : vector<16x128xf32>
    %15 = math.exp %14 : vector<16x128xf32>
    %16 = arith.mulf %12, %15 : vector<16x128xf32>
    %17 = arith.addf %16, %4 : vector<16x128xf32>
    %18 = arith.addf %6, %9 : vector<16x128xf32>
    %19 = arith.addf %17, %18 : vector<16x128xf32>
    %c1_i32 = arith.constant 1 : i32
    %20 = arith.muli %arg0, %c1_i32 : i32
    %21 = arith.addi %20, %arg1 : i32
    %c16_i32 = arith.constant 16 : i32
    %22 = arith.muli %21, %c16_i32 : i32
    %23 = tpu.iota {dimensions = array<i32: 0>} : vector<16x128xi32>
    %24 = tpu.iota {dimensions = array<i32: 1>} : vector<16x128xi32>
    %25 = vector.broadcast %22 : i32 to vector<16x128xi32>
    %26 = arith.addi %25, %23 : vector<16x128xi32>
    %c128_i32 = arith.constant 128 : i32
    %27 = vector.broadcast %c128_i32 : i32 to vector<16x128xi32>
    %28 = arith.muli %26, %27 : vector<16x128xi32>
    %29 = arith.addi %28, %24 : vector<16x128xi32>
    %c2048_i32 = arith.constant 2048 : i32
    %30 = vector.broadcast %c2048_i32 : i32 to vector<16x128xi32>
    %31 = arith.cmpi slt, %29, %30 : vector<16x128xi32>
    %cst_7 = arith.constant 0.000000e+00 : f32
    %32 = vector.broadcast %cst_7 : f32 to vector<16x128xf32>
    %33 = arith.select %31, %19, %32 : vector<16x128xi1>, vector<16x128xf32>
    %c0_8 = arith.constant 0 : index
    %c0_9 = arith.constant 0 : index
    %34 = vector.load %arg5[%c0_8, %c0_9] : memref<8x128xf32, #tpu.memory_space<vmem>>, vector<8x128xf32>
    %35 = vector.shape_cast %33 : vector<16x128xf32> to vector<2x8x128xf32>
    %cst_10 = arith.constant dense<0.000000e+00> : vector<8x128xf32>
    %36 = vector.multi_reduction <add>, %35, %cst_10 [0] : vector<2x8x128xf32> to vector<8x128xf32>
    %37 = arith.addf %34, %36 : vector<8x128xf32>
    %c0_11 = arith.constant 0 : index
    %c0_12 = arith.constant 0 : index
    %38 = vector.load %arg5[%c0_11, %c0_12] : memref<8x128xf32, #tpu.memory_space<vmem>>, vector<8x128xf32>
    tpu.vector_store %arg5[%c0_11, %c0_12], %37 {strides = array<i32>} : memref<8x128xf32, #tpu.memory_space<vmem>>, vector<8x128xf32>,
    return
  }
  func.func @transform_0(%arg0: i32, %arg1: i32) -> (i32, i32) {
    %c1_i32 = arith.constant 1 : i32
    %0 = arith.muli %arg0, %c1_i32 : i32
    %1 = arith.addi %0, %arg1 : i32
    %c0_i32 = arith.constant 0 : i32
    %c0_i32_0 = arith.constant 0 : i32
    return %1, %c0_i32 : i32, i32
  }
  func.func @transform_1(%arg0: i32, %arg1: i32) -> (i32, i32) {
    %c1_i32 = arith.constant 1 : i32
    %0 = arith.muli %arg0, %c1_i32 : i32
    %1 = arith.addi %0, %arg1 : i32
    %c0_i32 = arith.constant 0 : i32
    %c0_i32_0 = arith.constant 0 : i32
    return %1, %c0_i32 : i32, i32
  }
  func.func @transform_2(%arg0: i32, %arg1: i32) -> (i32, i32) {
    %c1_i32 = arith.constant 1 : i32
    %0 = arith.muli %arg0, %c1_i32 : i32
    %1 = arith.addi %0, %arg1 : i32
    %c0_i32 = arith.constant 0 : i32
    %c0_i32_0 = arith.constant 0 : i32
    return %1, %c0_i32 : i32, i32
  }
  func.func @transform_3(%arg0: i32, %arg1: i32) -> (i32, i32) {
    %c0_i32 = arith.constant 0 : i32
    %c0_i32_0 = arith.constant 0 : i32
    return %arg0, %c0_i32 : i32, i32
  }
}

</mosaic_0001>

<llo_original>
// kernel: tpu_custom_call.1
$region0: #{tpu_custom_call.1}
  #allocation0 [shape = 'u32[]', space=smem, size = 0x4, offset = 0x4, fixed_abs, tag = 'smem constant byte address 0x4 - core index']
  #allocation1 [shape = 'u32[144,128]{1,0:T(1,128)}', space=vmem, size = 0x12000, scoped, tag = 'internal scratch']
  %s0 = inlined_call_operand.hbm [shape: f32[32,128], index: 0, kind: input, shape index: {}]
  %s1 = inlined_call_operand.hbm [shape: f32[32,128], index: 1, kind: input, shape index: {}]
  %s2 = inlined_call_operand.hbm [shape: f32[32,128], index: 2, kind: input, shape index: {}]
  %s3 = inlined_call_operand.hbm [shape: f32[16,128], index: 3, kind: output, shape index: {}]
  %s4 = sld [smem:[#allocation0]]
  $region61: #{tpu_custom_call.1} parent=0
    _
  %s6 = ssub.s32 1, %s4
  %s7 = scalar_select 0, %s6, %s4
  $region1: #{tpu_custom_call.1} parent=0
    #allocation2 [shape = 'u8[16384]{0}', space=vmem, size = 0x4000, scoped, tag = 'input window, operand 0']
    #allocation3 [shape = 's32[2]{0}', space=sflag, size = 0x8, scoped, tag = 'scoped memory for tpu_custom_call.1']
    #allocation4 [shape = 's32[2]{0}', space=sflag, size = 0x8, scoped, tag = 'scoped memory for tpu_custom_call.1']
    #allocation5 [shape = 'u8[16384]{0}', space=vmem, size = 0x4000, scoped, tag = 'input window, operand 1']
    #allocation6 [shape = 's32[2]{0}', space=sflag, size = 0x8, scoped, tag = 'scoped memory for tpu_custom_call.1']
    #allocation7 [shape = 'u8[16384]{0}', space=vmem, size = 0x4000, scoped, tag = 'input window, operand 2']
    #allocation8 [shape = 'u8[8192]{0}', space=vmem, size = 0x2000, scoped, tag = 'output window, operand 0']
    %8 = vsyncpa [#allocation3], 0
    %s9 = scalar_lea.sflag [#allocation3], 1
    %10 = vsyncpa %s9, 0
    %11 = vsyncpa [#allocation6], 0
    %s12 = scalar_lea.sflag [#allocation6], 1
    %13 = vsyncpa %s12, 0
    %14 = vsyncpa [#allocation4], 0
    %s15 = scalar_lea.sflag [#allocation4], 1
    %16 = vsyncpa %s15, 0
    loop: start=0, step=1, limit=4
    $region2: #{tpu_custom_call.1} parent=1 // loop_pre_header
      _
    $region3: #{tpu_custom_call.1} parent=1 // loop_header
      %s18 = sphi 0, %s22
      %p19 = scmp.ge.s32.totalorder %s18, 4
      %s25 = sphi 0, %s37
      %s26 = sphi 0, %s33
      %s27 = sphi 0, %s25
      %s28 = sphi 0, %s26
      %s29 = sphi 0, %s27
      %s30 = sphi 0, %s28
      %s42 = sphi 0, %s44
      %s45 = sphi 0, %s42
      %s46 = sphi 0, %s45
      %s62 = sphi 0, %s46
      %s70 = sphi 0, %s72
      %s73 = sphi 0, %s70
      %s74 = sphi 0, %s73
      %s90 = sphi 0, %s74
      %s98 = sphi 0, %s100
      %s101 = sphi 0, %s98
      %s102 = sphi 0, %s101
      %s118 = sphi 0, %s102
      %s124 = sphi 0, %s126
      %s127 = sphi 0, %s124
      %s128 = sphi 0, %s127
      %s144 = sphi 0, %s128
    $region4: #{tpu_custom_call.1} parent=1 // loop_header_branch
      %21 = sbr.rel (%p19) target = $region8
    $region5: #{tpu_custom_call.1} parent=1 // loop_body
      %s23 = ssub.s32 %s18, 1
      %s24 = ssub.s32 %s18, 2
      %s31 = sadd.s32 1, %s26
      %p32 = scmp.ge.s32.totalorder %s31, 1
      %s33 = scalar_select %p32, 0, %s31
      %s34 = sadd.s32 1, %s25
      %s35 = scalar_select %p32, %s34, %s25
      %p36 = scmp.ge.s32.totalorder %s35, 2
      %s37 = scalar_select %p36, 0, %s35
      %s38 = sadd.s32 %s25, %s26
      %s39 = sadd.s32 %s37, %s33
      %s40 = ssub.s32 %s38, %s39
      %p41 = scmp.eq.s32.totalorder %s40, 0
      %s43 = sadd.s32 %s42, 1
      %s44 = scalar_select %p41, %s42, %s43
      %p47 = pneg %p41
      %p48 = scmp.eq.s32.totalorder %s18, 1
      %p49 = por %p47, %p48
      %p50 = scmp.ne.s32.totalorder %s42, %s45
      %p51 = scmp.eq.s32.totalorder %s18, 0
      %p52 = por %p50, %p51
      %p53 = scmp.ne.s32.totalorder %s42, %s45
      %p54 = scmp.eq.s32.totalorder %s23, 1
      %p55 = por %p53, %p54
      %p56 = scmp.ne.s32.totalorder %s45, %s46
      %p57 = scmp.eq.s32.totalorder %s23, 0
      %p58 = por %p56, %p57
      %p59 = scmp.ne.s32.totalorder %s45, %s46
      %p60 = scmp.eq.s32.totalorder %s24, 1
      %p61 = por %p59, %p60
      %p63 = scmp.ne.s32.totalorder %s46, %s62
      %p64 = scmp.eq.s32.totalorder %s24, 0
      %p65 = por %p63, %p64
      %s66 = sadd.s32 %s25, %s26
      %s67 = sadd.s32 %s37, %s33
      %s68 = ssub.s32 %s66, %s67
      %p69 = scmp.eq.s32.totalorder %s68, 0
      %s71 = sadd.s32 %s70, 1
      %s72 = scalar_select %p69, %s70, %s71
      %p75 = pneg %p69
      %p76 = scmp.eq.s32.totalorder %s18, 1
      %p77 = por %p75, %p76
      %p78 = scmp.ne.s32.totalorder %s70, %s73
      %p79 = scmp.eq.s32.totalorder %s18, 0
      %p80 = por %p78, %p79
      %p81 = scmp.ne.s32.totalorder %s70, %s73
      %p82 = scmp.eq.s32.totalorder %s23, 1
      %p83 = por %p81, %p82
      %p84 = scmp.ne.s32.totalorder %s73, %s74
      %p85 = scmp.eq.s32.totalorder %s23, 0
      %p86 = por %p84, %p85
      %p87 = scmp.ne.s32.totalorder %s73, %s74
      %p88 = scmp.eq.s32.totalorder %s24, 1
      %p89 = por %p87, %p88
      %p91 = scmp.ne.s32.totalorder %s74, %s90
      %p92 = scmp.eq.s32.totalorder %s24, 0
      %p93 = por %p91, %p92
      %s94 = sadd.s32 %s25, %s26
      %s95 = sadd.s32 %s37, %s33
      %s96 = ssub.s32 %s94, %s95
      %p97 = scmp.eq.s32.totalorder %s96, 0
      %s99 = sadd.s32 %s98, 1
      %s100 = scalar_select %p97, %s98, %s99
      %p103 = pneg %p97
      %p104 = scmp.eq.s32.totalorder %s18, 1
      %p105 = por %p103, %p104
      %p106 = scmp.ne.s32.totalorder %s98, %s101
      %p107 = scmp.eq.s32.totalorder %s18, 0
      %p108 = por %p106, %p107
      %p109 = scmp.ne.s32.totalorder %s98, %s101
      %p110 = scmp.eq.s32.totalorder %s23, 1
      %p111 = por %p109, %p110
      %p112 = scmp.ne.s32.totalorder %s101, %s102
      %p113 = scmp.eq.s32.totalorder %s23, 0
      %p114 = por %p112, %p113
      %p115 = scmp.ne.s32.totalorder %s101, %s102
      %p116 = scmp.eq.s32.totalorder %s24, 1
      %p117 = por %p115, %p116
      %p119 = scmp.ne.s32.totalorder %s102, %s118
      %p120 = scmp.eq.s32.totalorder %s24, 0
      %p121 = por %p119, %p120
      %s122 = ssub.s32 %s25, %s37
      %p123 = scmp.eq.s32.totalorder %s122, 0
      %s125 = sadd.s32 %s124, 1
      %s126 = scalar_select %p123, %s124, %s125
      %p129 = pneg %p123
      %p130 = scmp.eq.s32.totalorder %s18, 1
      %p131 = por %p129, %p130
      %p132 = scmp.ne.s32.totalorder %s124, %s127
      %p133 = scmp.eq.s32.totalorder %s18, 0
      %p134 = por %p132, %p133
      %p135 = scmp.ne.s32.totalorder %s124, %s127
      %p136 = scmp.eq.s32.totalorder %s23, 1
      %p137 = por %p135, %p136
      %p138 = scmp.ne.s32.totalorder %s127, %s128
      %p139 = scmp.eq.s32.totalorder %s23, 0
      %p140 = por %p138, %p139
      %p141 = scmp.ne.s32.totalorder %s127, %s128
      %p142 = scmp.eq.s32.totalorder %s24, 1
      %p143 = por %p141, %p142
      %p145 = scmp.ne.s32.totalorder %s128, %s144
      %p146 = scmp.eq.s32.totalorder %s24, 0
      %p147 = por %p145, %p146
      %p148 = scmp.le.s32.totalorder 1, %s18
      %p149 = scmp.lt.s32.totalorder %s18, 3
      %p150 = pnand %p148, %p149
      %p151 = pneg %p150
      // Predicated region
      $region9: #{tpu_custom_call.1} parent=5 // pred_check
        _
      $region10: #{tpu_custom_call.1} parent=5 // pred_check_branch
        %153 = sbr.rel (%p150) target = $region12
      $region11: #{tpu_custom_call.1} parent=5 // pred_region
        %s154 = ssub.s32 %s18, 1
      $region12: #{tpu_custom_call.1} parent=5 // pred_fallthru
        _
      %p155 = scmp.lt.s32.totalorder %s18, 2
      // Predicated region
      $region13: #{tpu_custom_call.1} parent=5 // pred_check
        %p156 = pneg %p155
      $region14: #{tpu_custom_call.1} parent=5 // pred_check_branch
        %158 = sbr.rel (%p156) target = $region16
      $region15: #{tpu_custom_call.1} parent=5 // pred_region
        // Predicated region
        $region17: #{tpu_custom_call.1} parent=15 // pred_check
          %p159 = pneg %p52
        $region18: #{tpu_custom_call.1} parent=15 // pred_check_branch
          %161 = sbr.rel (%p159) target = $region20
        $region19: #{tpu_custom_call.1} parent=15 // pred_region
          %s162 = sand.u32 %s42, 1
          %s163 = scalar_lea.sflag [#allocation3], %s162
          %s164 = sand.u32 %s42, 1
          %s165 = smul.addr %s164, 16
          %s166 = scalar_lea.vmem [#allocation2], %s165
          %s167 = sadd.s32 %s25, %s26
          %s168 = smul.u32 2, %s167
          %s170 = ssub.s32 256, 256
          %171 = vsyncadd %s163, %s170
          %s172 = smul.addr %s168, 128
          %s173 = scalar_lea.hbm %s0, %s172
          %s174 = sshll.u32 %s166, 4
          %s175 = int_to_ptr.vmem [resolvable:$true] %s174
          %180 = dma.hbm_to_vmem [thread:$0]  %s173, 256, %s175, %s163, 128, 128, 8
        $region20: #{tpu_custom_call.1} parent=15 // pred_fallthru
          _
        // Predicated region
        $region21: #{tpu_custom_call.1} parent=15 // pred_check
          %p181 = pneg %p80
        $region22: #{tpu_custom_call.1} parent=15 // pred_check_branch
          %183 = sbr.rel (%p181) target = $region24
        $region23: #{tpu_custom_call.1} parent=15 // pred_region
          %s184 = sand.u32 %s18, 1
          %s185 = scalar_lea.sflag [#allocation6], %s184
          %s186 = sand.u32 %s70, 1
          %s187 = smul.addr %s186, 16
          %s188 = scalar_lea.vmem [#allocation5], %s187
          %s189 = sadd.s32 %s25, %s26
          %s190 = smul.u32 2, %s189
          %s192 = ssub.s32 256, 256
          %193 = vsyncadd %s185, %s192
          %s194 = smul.addr %s190, 128
          %s195 = scalar_lea.hbm %s1, %s194
          %s196 = sshll.u32 %s188, 4
          %s197 = int_to_ptr.vmem [resolvable:$true] %s196
          %202 = dma.hbm_to_vmem [thread:$0]  %s195, 256, %s197, %s185, 128, 128, 8
        $region24: #{tpu_custom_call.1} parent=15 // pred_fallthru
          _
        // Predicated region
        $region25: #{tpu_custom_call.1} parent=15 // pred_check
          %p203 = pneg %p108
        $region26: #{tpu_custom_call.1} parent=15 // pred_check_branch
          %205 = sbr.rel (%p203) target = $region28
        $region27: #{tpu_custom_call.1} parent=15 // pred_region
          %s206 = sand.u32 %s18, 1
          %s207 = scalar_lea.sflag [#allocation6], %s206
          %s208 = sand.u32 %s98, 1
          %s209 = smul.addr %s208, 16
          %s210 = scalar_lea.vmem [#allocation7], %s209
          %s211 = sadd.s32 %s25, %s26
          %s212 = smul.u32 2, %s211
          %s214 = ssub.s32 256, 256
          %215 = vsyncadd %s207, %s214
          %s216 = smul.addr %s212, 128
          %s217 = scalar_lea.hbm %s2, %s216
          %s218 = sshll.u32 %s210, 4
          %s219 = int_to_ptr.vmem [resolvable:$true] %s218
          %224 = dma.hbm_to_vmem [thread:$0]  %s217, 256, %s219, %s207, 128, 128, 8
        $region28: #{tpu_custom_call.1} parent=15 // pred_fallthru
          _
      $region16: #{tpu_custom_call.1} parent=5 // pred_fallthru
        _
      %p225 = scmp.le.s32.totalorder 1, %s18
      %p226 = scmp.lt.s32.totalorder %s18, 3
      %p227 = pnand %p225, %p226
      %p228 = pneg %p227
      // Predicated region
      $region29: #{tpu_custom_call.1} parent=5 // pred_check
        _
      $region30: #{tpu_custom_call.1} parent=5 // pred_check_branch
        %230 = sbr.rel (%p227) target = $region32
      $region31: #{tpu_custom_call.1} parent=5 // pred_region
        %s231 = ssub.s32 %s18, 1
        %s232 = sand.u32 %s45, 1
        %s233 = scalar_lea.sflag [#allocation3], %s232
        %s234 = sand.u32 %s45, 1
        %s235 = smul.addr %s234, 16
        %s236 = scalar_lea.vmem [#allocation2], %s235
        // Predicated region
        $region33: #{tpu_custom_call.1} parent=31 // pred_check
          %p237 = pneg %p58
        $region34: #{tpu_custom_call.1} parent=31 // pred_check_branch
          %239 = sbr.rel (%p237) target = $region36
        $region35: #{tpu_custom_call.1} parent=31 // pred_region
          %240 = dma.done %s233, 256
        $region36: #{tpu_custom_call.1} parent=31 // pred_fallthru
          _
        %s241 = sand.u32 %s23, 1
        %s242 = scalar_lea.sflag [#allocation6], %s241
        %s243 = sand.u32 %s73, 1
        %s244 = smul.addr %s243, 16
        %s245 = scalar_lea.vmem [#allocation5], %s244
        // Predicated region
        $region37: #{tpu_custom_call.1} parent=31 // pred_check
          %p246 = pneg %p86
        $region38: #{tpu_custom_call.1} parent=31 // pred_check_branch
          %248 = sbr.rel (%p246) target = $region40
        $region39: #{tpu_custom_call.1} parent=31 // pred_region
          %249 = dma.done %s242, 256
        $region40: #{tpu_custom_call.1} parent=31 // pred_fallthru
          _
        %s250 = sand.u32 %s23, 1
        %s251 = scalar_lea.sflag [#allocation6], %s250
        %s252 = sand.u32 %s101, 1
        %s253 = smul.addr %s252, 16
        %s254 = scalar_lea.vmem [#allocation7], %s253
        // Predicated region
        $region41: #{tpu_custom_call.1} parent=31 // pred_check
          %p255 = pneg %p114
        $region42: #{tpu_custom_call.1} parent=31 // pred_check_branch
          %257 = sbr.rel (%p255) target = $region44
        $region43: #{tpu_custom_call.1} parent=31 // pred_region
          %258 = dma.done %s251, 256
        $region44: #{tpu_custom_call.1} parent=31 // pred_fallthru
          _
        %s259 = sand.u32 %s45, 1
        %s260 = scalar_lea.sflag [#allocation3], %s259
        %s261 = sand.u32 %s45, 1
        %s262 = smul.addr %s261, 16
        %s263 = scalar_lea.vmem [#allocation2], %s262
        %p264 = pneg %p58
        %p265 = pneg %p55
        %s266 = sand.u32 %s23, 1
        %s267 = scalar_lea.sflag [#allocation6], %s266
        %s268 = sand.u32 %s73, 1
        %s269 = smul.addr %s268, 16
        %s270 = scalar_lea.vmem [#allocation5], %s269
        %p271 = pneg %p86
        %p272 = pneg %p83
        %s273 = sand.u32 %s23, 1
        %s274 = scalar_lea.sflag [#allocation6], %s273
        %s275 = sand.u32 %s101, 1
        %s276 = smul.addr %s275, 16
        %s277 = scalar_lea.vmem [#allocation7], %s276
        %p278 = pneg %p114
        %p279 = pneg %p111
        %p280 = pneg %p140
        %p281 = pneg %p137
        %s282 = sand.u32 %s127, 1
        %s283 = scalar_lea.sflag [#allocation4], %s282
        %s284 = sand.u32 %s127, 1
        %s285 = smul.addr %s284, 8
        %s286 = scalar_lea.vmem [#allocation8], %s285
        %s287 = sadd.s32 %s27, %s28
        %s288 = smul.u32 2, %s287
        %s289 = sadd.s32 %s27, %s28
        %s290 = smul.u32 2, %s289
        %s291 = sadd.s32 %s27, %s28
        %s292 = smul.u32 2, %s291
        %p293 = scmp.eq.s32.totalorder %s28, 0
        // Predicated region
        $region45: #{tpu_custom_call.1} parent=31 // pred_check
          %p294 = pneg %p293
        $region46: #{tpu_custom_call.1} parent=31 // pred_check_branch
          %296 = sbr.rel (%p294) target = $region48
        $region47: #{tpu_custom_call.1} parent=31 // pred_region
          %297 = vst [vmem:[%s286] sm:$0xff] 0.0
        $region48: #{tpu_custom_call.1} parent=31 // pred_fallthru
          _
        %v298 = vld [vmem:[%s236] sm:$0xff]
        %v299 = vld [vmem:[%s236 + $0x8] sm:$0xff]
        %v300 = vld [vmem:[%s245] sm:$0xff]
        %v301 = vld [vmem:[%s245 + $0x8] sm:$0xff]
        %v302 = vld [vmem:[%s254] sm:$0xff]
        %v303 = vld [vmem:[%s254 + $0x8] sm:$0xff]
        %v304 = vlog2.pop %v302
        %v305 = vmul.f32 %v304, 0.6931472
        %v306 = vlog2.pop %v303
        %v307 = vmul.f32 %v306, 0.6931472
        %v308 = vsub.f32 1.0, %v302
        %v309 = vsub.f32 1.0, %v303
        %v310 = vlog2.pop %v308
        %v311 = vmul.f32 %v310, 0.6931472
        %v312 = vlog2.pop %v309
        %v313 = vmul.f32 %v312, 0.6931472
        %v314 = vsub.f32 %v305, %v311
        %v315 = vsub.f32 %v307, %v313
        %v316 = vsub.f32 %v314, %v298
        %v317 = vsub.f32 %v315, %v299
        %v318 = vand.u32 2147483647, %v316
        %v319 = vand.u32 2147483647, %v317
        %v320 = vsub.f32 0.0, %v300
        %v321 = vsub.f32 0.0, %v301
        %v322 = vmul.f32 %v320, 1.442695
        %v323 = vpow.pop %v322
        %v324 = vmul.f32 %v321, 1.442695
        %v325 = vpow.pop %v324
        %v326 = vmul.f32 %v318, %v323
        %v327 = vmul.f32 %v319, %v325
        %v328 = vadd.f32 %v326, %v300
        %v329 = vadd.f32 %v327, %v301
        %v330 = vadd.f32 %v305, %v311
        %v331 = vadd.f32 %v307, %v313
        %v332 = vadd.f32 %v328, %v330
        %v333 = vadd.f32 %v329, %v331
        %s334 = sadd.s32 %s27, %s28
        %s335 = smul.u32 %s334, 16
        %v336 = vlaneseq
        %v337 = vshrl.u32 %v336, 7
        %v338 = vadd.s32 %v337, 8
        %v339 = vlaneseq
        %v340 = vand.u32 %v339, 127
        %v341 = vstv %s335
        %v342 = vadd.s32 %v341, %v337
        %v343 = vadd.s32 %v341, %v338
        %v344 = vmul.u32 %v342, 128
        %v345 = vmul.u32 %v343, 128
        %v346 = vadd.s32 %v344, %v340
        %v347 = vadd.s32 %v345, %v340
        %vm348 = vcmp.lt.s32.totalorder %v346, 2048
        %vm349 = vcmp.lt.s32.totalorder %v347, 2048
        %v350 = vsel %vm348, %v332, 0.0
        %v351 = vsel %vm349, %v333, 0.0
        %v352 = vld [vmem:[%s286] sm:$0xff]
        %v353 = vadd.f32 %v350, %v351
        %v354 = vadd.f32 %v352, %v353
        %355 = vst [vmem:[%s286] sm:$0xff] %v354
        %s356 = sand.u32 %s127, 1
        %s357 = scalar_lea.sflag [#allocation4], %s356
        %s358 = sand.u32 %s127, 1
        %s359 = smul.addr %s358, 8
        %s360 = scalar_lea.vmem [#allocation8], %s359
        // Predicated region
        $region49: #{tpu_custom_call.1} parent=31 // pred_check
          %p361 = pneg %p137
        $region50: #{tpu_custom_call.1} parent=31 // pred_check_branch
          %363 = sbr.rel (%p361) target = $region52
        $region51: #{tpu_custom_call.1} parent=31 // pred_region
          %s365 = ssub.s32 128, 128
          %366 = vsyncadd %s357, %s365
          %s367 = smul.addr %s27, 128
          %s368 = scalar_lea.hbm %s3, %s367
          %s370 = sshll.u32 %s360, 4
          %s371 = int_to_ptr.vmem [resolvable:$true] %s370
          %373 = dma.vmem_to_hbm [thread:$0]  %s371, 128, %s368, %s357
        $region52: #{tpu_custom_call.1} parent=31 // pred_fallthru
          _
      $region32: #{tpu_custom_call.1} parent=5 // pred_fallthru
        _
      %p374 = scmp.le.s32.totalorder 2, %s18
      // Predicated region
      $region53: #{tpu_custom_call.1} parent=5 // pred_check
        %p375 = pneg %p374
      $region54: #{tpu_custom_call.1} parent=5 // pred_check_branch
        %377 = sbr.rel (%p375) target = $region56
      $region55: #{tpu_custom_call.1} parent=5 // pred_region
        %s378 = ssub.s32 %s18, 2
        // Predicated region
        $region57: #{tpu_custom_call.1} parent=55 // pred_check
          %p379 = pneg %p143
        $region58: #{tpu_custom_call.1} parent=55 // pred_check_branch
          %381 = sbr.rel (%p379) target = $region60
        $region59: #{tpu_custom_call.1} parent=55 // pred_region
          %s382 = sand.u32 %s128, 1
          %s383 = scalar_lea.sflag [#allocation4], %s382
          %s384 = sand.u32 %s128, 1
          %s385 = smul.addr %s384, 8
          %s386 = scalar_lea.vmem [#allocation8], %s385
          %387 = dma.done %s383, 128
        $region60: #{tpu_custom_call.1} parent=55 // pred_fallthru
          _
      $region56: #{tpu_custom_call.1} parent=5 // pred_fallthru
        _
    $region6: #{tpu_custom_call.1} parent=1 // loop_footer
      %s22 = sadd.s32 1, %s18
    $region7: #{tpu_custom_call.1} parent=1 // loop_footer_branch
      %17 = sbr.rel target = $region3
    $region8: #{tpu_custom_call.1} parent=1 // loop_exit
      _
    %388 = vsyncpa [#allocation3], 1
    %s389 = scalar_lea.sflag [#allocation3], 1
    %390 = vsyncpa %s389, 1
    %391 = vsyncpa [#allocation6], 1
    %s392 = scalar_lea.sflag [#allocation6], 1
    %393 = vsyncpa %s392, 1
    %394 = vsyncpa [#allocation4], 1
    %s395 = scalar_lea.sflag [#allocation4], 1
    %396 = vsyncpa %s395, 1

</llo_original>
